<compile_context>
chip_gen: v7x
topology: tpu7x:2x2x1
jax: 0.10.0
libtpu: 0.0.40
codegen_flags: <defaults>
</compile_context>

<pallas_src>
import jax
import jax.numpy as jnp
from jax.experimental import pallas as pl
from jax.experimental.pallas import tpu as pltpu

_LANES = 128
_MIN_STEPS = 8                    # aim for >= this many grid steps on big inputs
_MIN_SPLIT_BYTES = 512 * 1024     # ...but never shrink blocks below ~512 KiB
_VMEM_LIMIT_BYTES = 40 << 20      # explicit scoped-VMEM budget (safe on v5e/v6e/v7x)


def _tanh_kernel(x_ref, o_ref):
    # Elementwise tanh on the current VMEM tile (EUP transcendental path).
    # No dtype promotion: bf16 in -> bf16 out.
    o_ref[...] = jnp.tanh(x_ref[...])


def _sublane_floor(dtype) -> int:
    # Minimum packed sublane tile: 8 for 32-bit, 16 for 16-bit, 32 for 8-bit.
    itemsize = jnp.dtype(dtype).itemsize
    return max(8, 32 // max(itemsize, 1))


def _round_up(x: int, m: int) -> int:
    return ((x + m - 1) // m) * m


def _round_down(x: int, m: int) -> int:
    return (x // m) * m


def _tanh_slab(x2d: jax.Array, *, target_block_bytes: int) -> jax.Array:
    """Run the Pallas tanh kernel over a lane-dense (rows, width) slab."""
    rows, width = x2d.shape
    dtype = x2d.dtype
    itemsize = jnp.dtype(dtype).itemsize
    sub = _sublane_floor(dtype)
    row_bytes = width * itemsize

    # Big-block target (~target_block_bytes per block), sublane-aligned.
    tr = max(_round_down(target_block_bytes // row_bytes, sub), sub)

    # Cap tr so large inputs get ~_MIN_STEPS grid steps (pipeline + megacore
    # sharding engage) without ever splitting below ~_MIN_SPLIT_BYTES blocks.
    floor_rows = max(sub, _round_up(pl.cdiv(_MIN_SPLIT_BYTES, row_bytes), sub))
    tr_split = max(_round_up(pl.cdiv(rows, _MIN_STEPS), sub), floor_rows)
    tr = min(tr, tr_split)

    if tr >= rows:
        tr = rows  # single block; block dim == full array dim is always legal

    grid = (pl.cdiv(rows, tr),)  # ragged trailing block handled by Pallas
    n = rows * width

    return pl.pallas_call(
        _tanh_kernel,
        out_shape=jax.ShapeDtypeStruct((rows, width), dtype),
        grid_spec=pltpu.PrefetchScalarGridSpec(
            num_scalar_prefetch=0,
            grid=grid,
            in_specs=[pl.BlockSpec((tr, width), lambda i: (i, 0))],
            out_specs=pl.BlockSpec((tr, width), lambda i: (i, 0)),
        ),
        compiler_params=pltpu.CompilerParams(
            dimension_semantics=("parallel",),
            vmem_limit_bytes=_VMEM_LIMIT_BYTES,
        ),
        cost_estimate=pl.CostEstimate(
            flops=0,
            transcendentals=n,
            bytes_accessed=2 * n * itemsize,
        ),
    )(x2d)


def pallas_tanh(x: jax.Array, *, target_block_bytes: int = 6 * 1024 * 1024) -> jax.Array:
    """Elementwise tanh via a Pallas TPU kernel. Works for any input shape."""
    orig_shape = x.shape
    n = x.size
    if n == 0:
        return x

    x_flat = x.reshape(-1)
    n_main = (n // _LANES) * _LANES  # 128-aligned prefix handled by the kernel
    rem = n - n_main                  # < 128-element tail handled outside

    if n_main == 0:
        # Tiny input (< 128 elements): kernel launch overhead dominates.
        return jnp.tanh(x)

    # Widest lane-dense last dim that divides the prefix (contiguous reshape,
    # metadata only) -> wide unmasked vector stores, fewer DMA descriptors.
    width = _LANES
    for w in (1024, 512, 256, 128):
        if n_main % w == 0:
            width = w
            break

    main = x_flat[:n_main].reshape(n_main // width, width)
    out_main = _tanh_slab(main, target_block_bytes=target_block_bytes).reshape(-1)

    if rem == 0:
        return out_main.reshape(orig_shape)

    # Ragged tail: plain jnp.tanh on <128 elements, stitched back on.  This
    # avoids the whole-array pad + post-kernel slice round trips.
    tail = jnp.tanh(x_flat[n_main:])
    return jnp.concatenate([out_main, tail]).reshape(orig_shape)


if __name__ == "__main__":
    key = jax.random.PRNGKey(0)

    # Small NCHW-like activation input (128-divisible path, single block).
    x = jax.random.normal(key, (2, 4, 16, 16), dtype=jnp.float32)
    y = pallas_tanh(x)
    jax.block_until_ready(y)
    assert y.shape == x.shape and y.dtype == x.dtype
    assert jnp.max(jnp.abs(y - jnp.tanh(x))) < 1e-5

    # Larger activation (~2 MiB): exercises the multi-step pipelined grid.
    x1 = jax.random.normal(jax.random.PRNGKey(2), (4, 8, 128, 128), dtype=jnp.float32)
    y1 = pallas_tanh(x1)
    jax.block_until_ready(y1)
    assert y1.shape == x1.shape and y1.dtype == x1.dtype
    assert jnp.max(jnp.abs(y1 - jnp.tanh(x1))) < 1e-5

    # Awkward shape with a 128-aligned prefix plus a short tail (prefix kernel
    # + jnp.tanh tail path).
    x2 = jax.random.normal(jax.random.PRNGKey(1), (5, 130), dtype=jnp.float32)
    y2 = pallas_tanh(x2)
    jax.block_until_ready(y2)
    assert y2.shape == x2.shape and y2.dtype == x2.dtype
    assert jnp.max(jnp.abs(y2 - jnp.tanh(x2))) < 1e-5

    # Tiny (< 128 elements) input: pure fallback path.
    x3 = jax.random.normal(jax.random.PRNGKey(3), (3, 5, 7), dtype=jnp.float32)
    y3 = pallas_tanh(x3)
    jax.block_until_ready(y3)
    assert y3.shape == x3.shape and y3.dtype == x3.dtype
    assert jnp.max(jnp.abs(y3 - jnp.tanh(x3))) < 1e-5

    # bf16 I/O stays in-dtype (halves HBM bytes).
    xb = jax.random.normal(jax.random.PRNGKey(4), (2, 64, 256), dtype=jnp.bfloat16)
    yb = pallas_tanh(xb)
    jax.block_until_ready(yb)
    assert yb.shape == xb.shape and yb.dtype == xb.dtype
    assert jnp.max(jnp.abs(yb.astype(jnp.float32) - jnp.tanh(xb).astype(jnp.float32))) < 2e-2

    print("KERNEL_OK")
</pallas_src>

<mosaic_0001>
module attributes {stable_mosaic.version = 11 : i64} {
  func.func @_tanh_kernel(%arg0: i32, %arg1: memref<2x1024xf32, #tpu.memory_space<vmem>>, %arg2: memref<2x1024xf32, #tpu.memory_space<vmem>>) attributes {dimension_semantics = [#tpu.dimension_semantics<parallel>], iteration_bounds = array<i64: 1>, scalar_prefetch = 0 : i64, scratch_operands = 0 : i64, tpu.core_type = #tpu.core_type<tc>, window_params = [{transform_indices = @transform_0, window_bounds = array<i64: 2, 1024>}, {transform_indices = @transform_1, window_bounds = array<i64: 2, 1024>}]} {
    %c0 = arith.constant 0 : index
    %c0_0 = arith.constant 0 : index
    %0 = vector.load %arg1[%c0, %c0_0] : memref<2x1024xf32, #tpu.memory_space<vmem>>, vector<2x1024xf32>
    %1 = math.tanh %0 : vector<2x1024xf32>
    %c0_1 = arith.constant 0 : index
    %c0_2 = arith.constant 0 : index
    %2 = vector.load %arg2[%c0_1, %c0_2] : memref<2x1024xf32, #tpu.memory_space<vmem>>, vector<2x1024xf32>
    tpu.vector_store %arg2[%c0_1, %c0_2], %1 {strides = array<i32>} : memref<2x1024xf32, #tpu.memory_space<vmem>>, vector<2x1024xf32>,
    return
  }
  func.func @transform_0(%arg0: i32) -> (i32, i32) {
    %c0_i32 = arith.constant 0 : i32
    %c0_i32_0 = arith.constant 0 : i32
    return %arg0, %c0_i32 : i32, i32
  }
  func.func @transform_1(%arg0: i32) -> (i32, i32) {
    %c0_i32 = arith.constant 0 : i32
    %c0_i32_0 = arith.constant 0 : i32
    return %arg0, %c0_i32 : i32, i32
  }
}

</mosaic_0001>

<llo_original>
// kernel: tpu_custom_call.1
$region0: #{tpu_custom_call.1}
  #allocation0 [shape = 'u32[]', space=smem, size = 0x4, offset = 0x4, fixed_abs, tag = 'smem constant byte address 0x4 - core index']
  #allocation1 [shape = 'u32[144,128]{1,0:T(1,128)}', space=vmem, size = 0x12000, scoped, tag = 'internal scratch']
  %s0 = inlined_call_operand.hbm [shape: f32[2,1024], index: 0, kind: input, shape index: {}]
  %s1 = inlined_call_operand.hbm [shape: f32[2,1024], index: 1, kind: output, shape index: {}]
  %s2 = sld [smem:[#allocation0]]
  $region18: #{tpu_custom_call.1} parent=0
    _
  %s4 = ssub.s32 1, %s2
  %s5 = scalar_select 0, %s4, %s2
  $region1: #{tpu_custom_call.1} parent=0
    #allocation2 [shape = 'u8[8192]{0}', space=vmem, size = 0x2000, scoped, tag = 'input window, operand 0, single buffered']
    #allocation3 [shape = 's32[1]{0}', space=sflag, size = 0x4, scoped, tag = 'scoped memory for tpu_custom_call.1']
    #allocation4 [shape = 's32[1]{0}', space=sflag, size = 0x4, scoped, tag = 'scoped memory for tpu_custom_call.1']
    #allocation5 [shape = 'u8[8192]{0}', space=vmem, size = 0x2000, scoped, tag = 'output window, operand 0, single buffered']
    %6 = vsyncpa [#allocation3], 0
    %7 = vsyncpa [#allocation4], 0
    // Predicated region
    $region2: #{tpu_custom_call.1} parent=1 // pred_check
      _
    $region3: #{tpu_custom_call.1} parent=1 // pred_check_branch
      %9 = sbr.rel (0) target = $region5
    $region4: #{tpu_custom_call.1} parent=1 // pred_region
      %s11 = ssub.s32 256, 256
      %12 = vsyncadd [#allocation3], %s11
      %s14 = sshll.u32 [#allocation2], 4
      %s15 = int_to_ptr.vmem [resolvable:$true] %s14
      %17 = dma.hbm_to_vmem [thread:$0]  %s0, 256, %s15, [#allocation3]
    $region5: #{tpu_custom_call.1} parent=1 // pred_fallthru
      _
    // Predicated region
    $region6: #{tpu_custom_call.1} parent=1 // pred_check
      _
    $region7: #{tpu_custom_call.1} parent=1 // pred_check_branch
      %19 = sbr.rel (0) target = $region9
    $region8: #{tpu_custom_call.1} parent=1 // pred_region
      %20 = dma.done [#allocation3], 256
    $region9: #{tpu_custom_call.1} parent=1 // pred_fallthru
      _
    %v21 = vld [vmem:[#allocation2] sm:$0xff]
    %v22 = vld [vmem:[#allocation2 + $0x8] sm:$0xff]
    %v23 = vtanh.pop %v21
    %v24 = vtanh.pop %v22
    %25 = vst [vmem:[#allocation5] sm:$0xff] %v23
    %26 = vst [vmem:[#allocation5 + $0x8] sm:$0xff] %v24
    // Predicated region
    $region10: #{tpu_custom_call.1} parent=1 // pred_check
      _
    $region11: #{tpu_custom_call.1} parent=1 // pred_check_branch
      %28 = sbr.rel (0) target = $region13
    $region12: #{tpu_custom_call.1} parent=1 // pred_region
      %s30 = ssub.s32 256, 256
      %31 = vsyncadd [#allocation4], %s30
      %s33 = sshll.u32 [#allocation5], 4
      %s34 = int_to_ptr.vmem [resolvable:$true] %s33
      %36 = dma.vmem_to_hbm [thread:$0]  %s34, 256, %s1, [#allocation4]
    $region13: #{tpu_custom_call.1} parent=1 // pred_fallthru
      _
    // Predicated region
    $region14: #{tpu_custom_call.1} parent=1 // pred_check
      _
    $region15: #{tpu_custom_call.1} parent=1 // pred_check_branch
      %38 = sbr.rel (0) target = $region17
    $region16: #{tpu_custom_call.1} parent=1 // pred_region
      %39 = dma.done [#allocation4], 256
    $region17: #{tpu_custom_call.1} parent=1 // pred_fallthru
      _
    %40 = vsyncpa [#allocation3], 1
    %41 = vsyncpa [#allocation4], 1

</llo_original>
